<compile_context>
chip_gen: v7x
topology: tpu7x:2x2x1
jax: 0.10.0
libtpu: 0.0.40
codegen_flags: <defaults>
</compile_context>

<pallas_src>
import math

import jax
import jax.numpy as jnp
from jax.experimental import pallas as pl
from jax.experimental.pallas import tpu as pltpu


COUT_PAD = 128  # lane-dense output width (Cout=64 zero-padded to 128)


# ----------------------------- Pallas kernel ------------------------------- #

def _matmul_bias_kernel(x_ref, w_ref, b_ref, o_ref):
    # x_ref: (1, tm, K) bf16, w_ref: (1, K, 128) bf16,
    # b_ref: (1, 1, 128) f32, o_ref: (1, tm, 128) f32.
    acc = jnp.dot(x_ref[0], w_ref[0], preferred_element_type=jnp.float32)
    o_ref[0] = (acc + b_ref[0]).astype(o_ref.dtype)


def _pick_tm(m, k):
    """Rows per block: whole M if it fits a ~4 MiB bf16 budget, else the
    largest multiple of 128 that divides M and fits the budget."""
    budget = 4 * 1024 * 1024            # bytes for one (double-buffered) input block
    if m <= 128 or m * k * 2 <= budget:
        return m
    tm = min(m, max(128, ((budget // (k * 2)) // 128) * 128))
    while tm > 128 and m % tm:
        tm -= 128
    if m % tm:
        return m   # TODO(synk): pad ragged M instead of one oversized block
    return tm


def matmul_bias(patches, wmat, bias):
    """(G, M, K) @ (G, K, 128) + bias -> (G, M, 128) on the MXU.

    G = independent groups (1 for the conv, 4 deconv parity phases); on v7x the
    parallel grid lets the two TensorCores split the G/M blocks.
    """
    g, m, k = patches.shape
    _, _, npad = wmat.shape
    tm = _pick_tm(m, k)
    assert m % tm == 0

    return pl.pallas_call(
        _matmul_bias_kernel,
        out_shape=jax.ShapeDtypeStruct((g, m, npad), jnp.float32),
        grid_spec=pltpu.PrefetchScalarGridSpec(
            num_scalar_prefetch=0,
            grid=(g, m // tm),
            in_specs=[
                pl.BlockSpec((1, tm, k), lambda gi, i: (gi, i, 0)),
                pl.BlockSpec((1, k, npad), lambda gi, i: (gi, 0, 0)),
                pl.BlockSpec((1, 1, npad), lambda gi, i: (gi, 0, 0)),
            ],
            out_specs=pl.BlockSpec((1, tm, npad), lambda gi, i: (gi, i, 0)),
        ),
        compiler_params=pltpu.CompilerParams(
            dimension_semantics=("parallel", "parallel"),
            vmem_limit_bytes=32 * 1024 * 1024,
        ),
    )(patches, wmat, bias)


# ------------------------------ jitted forwards ----------------------------- #

@jax.jit
def _conv_down_fwd(x, wmat, bias):
    """Conv2d(64, 64, 3, stride=2, padding=1); x is NCHW, returns NCHW."""
    n, c, h, w = x.shape
    oh = (h + 2 - 3) // 2 + 1
    ow = (w + 2 - 3) // 2 + 1
    xh = jnp.transpose(x, (0, 2, 3, 1))                       # NHWC
    xp = jnp.pad(xh, ((0, 0), (1, 1), (1, 1), (0, 0)))
    # Channels-last im2col: K index = (dy*3 + dx)*C + ci (no stack/transpose).
    cols = [xp[:, dy:dy + 2 * oh:2, dx:dx + 2 * ow:2, :]
            for dy in range(3) for dx in range(3)]
    patches = jnp.concatenate(cols, axis=-1).reshape(1, n * oh * ow, 9 * c)
    out = matmul_bias(patches.astype(jnp.bfloat16), wmat, bias)   # (1, M, 128)
    out = out[0, :, :c].reshape(n, oh, ow, c)
    return jnp.transpose(out, (0, 3, 1, 2))                   # back to NCHW (module API)


@jax.jit
def _deconv_up_fwd(x, wmat, bias):
    """ConvTranspose2d(64, 64, 4, stride=2, padding=1) via 4 parity phases.

    out[n, co, 2a+r, 2b+s] = sum_{ci,dy,dx in {0,1}} xpad[n, a+r+dy, b+s+dx, ci]
                             * W[ci, co, ky(r,dy), kx(s,dx)] + bias[co]
    with ky(0,:)=(3,1), ky(1,:)=(2,0) (same for kx) and xpad = 1-pixel zero pad.
    K = 4*C = 256 per phase instead of 16*C over a zero-dilated input.
    """
    n, c, h, w = x.shape
    xh = jnp.transpose(x, (0, 2, 3, 1))                       # NHWC
    xp = jnp.pad(xh, ((0, 0), (1, 1), (1, 1), (0, 0)))        # (N, H+2, W+2, C)
    # 2x2 windows over the common padded input at all (H+1)x(W+1) positions.
    cols = [xp[:, dy:dy + h + 1, dx:dx + w + 1, :]
            for dy in (0, 1) for dx in (0, 1)]
    pa = jnp.concatenate(cols, axis=-1)                       # (N, H+1, W+1, 4C)
    phases = jnp.stack(
        [pa[:, r:r + h, s:s + w, :].reshape(n * h * w, 4 * c)
         for r in (0, 1) for s in (0, 1)], axis=0)            # (4, M, 4C), g = 2r+s
    out = matmul_bias(phases.astype(jnp.bfloat16), wmat, bias)    # (4, M, 128)
    out = out[:, :, :c].reshape(2, 2, n, h, w, c)             # (r, s, n, a, b, co)
    out = jnp.transpose(out, (2, 5, 3, 0, 4, 1))              # (n, co, a, r, b, s)
    return out.reshape(n, c, 2 * h, 2 * w)                    # NCHW


# ------------------------------ weight packing ------------------------------ #

def _pack_conv_weights(conv_w, conv_b):
    c_out, c_in, kh, kw = conv_w.shape
    wmat = conv_w.transpose(2, 3, 1, 0).reshape(kh * kw * c_in, c_out)  # K=(dy*3+dx)*C+ci
    wmat = jnp.pad(wmat, ((0, 0), (0, COUT_PAD - c_out)))
    bias = jnp.pad(conv_b, (0, COUT_PAD - c_out)).reshape(1, 1, COUT_PAD)
    return wmat[None].astype(jnp.bfloat16), bias.astype(jnp.float32)


def _pack_deconv_weights(deconv_w, deconv_b):
    c_in, c_out = deconv_w.shape[0], deconv_w.shape[1]
    mats = []
    for r in (0, 1):
        kys = (3, 1) if r == 0 else (2, 0)
        for s in (0, 1):
            kxs = (3, 1) if s == 0 else (2, 0)
            taps = [deconv_w[:, :, kys[dy], kxs[dx]]            # (Cin, Cout) each
                    for dy in (0, 1) for dx in (0, 1)]
            mats.append(jnp.concatenate(taps, axis=0))          # K=(dy*2+dx)*C+ci
    wmat = jnp.stack(mats, axis=0)                              # (4, 4C, Cout)
    wmat = jnp.pad(wmat, ((0, 0), (0, 0), (0, COUT_PAD - c_out)))
    bias = jnp.pad(deconv_b, (0, COUT_PAD - c_out)).reshape(1, 1, COUT_PAD)
    bias = jnp.tile(bias, (4, 1, 1))
    return wmat.astype(jnp.bfloat16), bias.astype(jnp.float32)


class Rescale:
    """Pallas port of the PyTorch Rescale module (synthetic deterministic init)."""

    def __init__(self, down=True, key=jax.random.PRNGKey(42)):
        self.down = down
        c = 64
        k1, k2, k3, k4 = jax.random.split(key, 4)

        # Conv2d(64, 64, 3, stride=2, padding=1): weight (Cout, Cin, 3, 3)
        bound_c = 1.0 / math.sqrt(c * 3 * 3)
        self.conv_w = jax.random.uniform(k1, (c, c, 3, 3), jnp.float32, -bound_c, bound_c)
        self.conv_b = jax.random.uniform(k2, (c,), jnp.float32, -bound_c, bound_c)

        # ConvTranspose2d(64, 64, 4, stride=2, padding=1): weight (Cin, Cout, 4, 4)
        bound_t = 1.0 / math.sqrt(c * 4 * 4)
        self.deconv_w = jax.random.uniform(k3, (c, c, 4, 4), jnp.float32, -bound_t, bound_t)
        self.deconv_b = jax.random.uniform(k4, (c,), jnp.float32, -bound_t, bound_t)

        # One-time repacking for the kernel (lane-dense, bf16).
        self.wmat_down, self.bias_down = _pack_conv_weights(self.conv_w, self.conv_b)
        self.wmat_up, self.bias_up = _pack_deconv_weights(self.deconv_w, self.deconv_b)

    def __call__(self, x):
        if self.down:
            return _conv_down_fwd(x, self.wmat_down, self.bias_down)
        return _deconv_up_fwd(x, self.wmat_up, self.bias_up)


# ---------------------------------- main ----------------------------------- #

if __name__ == "__main__":
    key = jax.random.PRNGKey(0)
    kx1, kx2, kparam = jax.random.split(key, 3)

    model_down = Rescale(down=True, key=kparam)
    model_up = Rescale(down=False, key=kparam)

    x_down = jax.random.normal(kx1, (2, 64, 16, 16), jnp.float32)  # NCHW
    x_up = jax.random.normal(kx2, (2, 64, 8, 8), jnp.float32)      # NCHW

    y_down = jax.block_until_ready(model_down(x_down))
    y_up = jax.block_until_ready(model_up(x_up))

    assert y_down.shape == (2, 64, 8, 8), y_down.shape
    assert y_up.shape == (2, 64, 16, 16), y_up.shape

    # ---- reference checks against XLA convolutions ---- #
    def ref_down(x, wgt, b):
        return jax.lax.conv_general_dilated(
            x, wgt, window_strides=(2, 2), padding=((1, 1), (1, 1)),
            dimension_numbers=("NCHW", "OIHW", "NCHW"),
            precision=jax.lax.Precision.HIGHEST,
        ) + b[None, :, None, None]

    def ref_up(x, wgt, b):
        w_eff = jnp.flip(wgt, axis=(2, 3)).transpose(1, 0, 2, 3)
        return jax.lax.conv_general_dilated(
            x, w_eff, window_strides=(1, 1), padding=((2, 2), (2, 2)),
            lhs_dilation=(2, 2), dimension_numbers=("NCHW", "OIHW", "NCHW"),
            precision=jax.lax.Precision.HIGHEST,
        ) + b[None, :, None, None]

    q = lambda a: a.astype(jnp.bfloat16).astype(jnp.float32)  # bf16 quantization

    # Tight check: same bf16-quantized operands as the kernel (accumulation-order only).
    assert jnp.allclose(y_down, ref_down(q(x_down), q(model_down.conv_w), model_down.conv_b),
                        atol=2e-3, rtol=2e-3)
    assert jnp.allclose(y_up, ref_up(q(x_up), q(model_up.deconv_w), model_up.deconv_b),
                        atol=2e-3, rtol=2e-3)

    # Loose check: full-f32 reference (bf16 input rounding bounds the gap).
    assert jnp.allclose(y_down, ref_down(x_down, model_down.conv_w, model_down.conv_b),
                        atol=1e-2, rtol=1e-2)
    assert jnp.allclose(y_up, ref_up(x_up, model_up.deconv_w, model_up.deconv_b),
                        atol=1e-2, rtol=1e-2)

    print("KERNEL_OK")
</pallas_src>

<mosaic_0001>
module attributes {stable_mosaic.version = 11 : i64} {
  func.func @_matmul_bias_kernel(%arg0: i32, %arg1: i32, %arg2: memref<1x128x576xbf16, #tpu.memory_space<vmem>>, %arg3: memref<1x576x128xbf16, #tpu.memory_space<vmem>>, %arg4: memref<1x1x128xf32, #tpu.memory_space<vmem>>, %arg5: memref<1x128x128xf32, #tpu.memory_space<vmem>>) attributes {dimension_semantics = [#tpu.dimension_semantics<parallel>, #tpu.dimension_semantics<parallel>], iteration_bounds = array<i64: 1, 1>, scalar_prefetch = 0 : i64, scratch_operands = 0 : i64, tpu.core_type = #tpu.core_type<tc>, window_params = [{transform_indices = @transform_0, window_bounds = array<i64: 1, 128, 576>}, {transform_indices = @transform_1, window_bounds = array<i64: 1, 576, 128>}, {transform_indices = @transform_2, window_bounds = array<i64: 1, 1, 128>}, {transform_indices = @transform_3, window_bounds = array<i64: 1, 128, 128>}]} {
    %c0 = arith.constant 0 : index
    %c0_0 = arith.constant 0 : index
    %c0_1 = arith.constant 0 : index
    %0 = vector.load %arg2[%c0, %c0_0, %c0_1] : memref<1x128x576xbf16, #tpu.memory_space<vmem>>, vector<1x128x576xbf16>
    %1 = vector.shape_cast %0 : vector<1x128x576xbf16> to vector<128x576xbf16>
    %c0_2 = arith.constant 0 : index
    %c0_3 = arith.constant 0 : index
    %c0_4 = arith.constant 0 : index
    %2 = vector.load %arg3[%c0_2, %c0_3, %c0_4] : memref<1x576x128xbf16, #tpu.memory_space<vmem>>, vector<1x576x128xbf16>
    %3 = vector.shape_cast %2 : vector<1x576x128xbf16> to vector<576x128xbf16>
    %cst = arith.constant dense<0.000000e+00> : vector<128x128xf32>
    %4 = tpu.matmul %1, %3, %cst {dimension_numbers = #tpu.dot_dimension_numbers<[1], [0], [0], [1], [0, 0, 1, 1], [], []>} : vector<128x576xbf16>, vector<576x128xbf16>, vector<128x128xf32> -> vector<128x128xf32>
    %c0_5 = arith.constant 0 : index
    %c0_6 = arith.constant 0 : index
    %c0_7 = arith.constant 0 : index
    %5 = vector.load %arg4[%c0_5, %c0_6, %c0_7] : memref<1x1x128xf32, #tpu.memory_space<vmem>>, vector<1x1x128xf32>
    %6 = vector.shape_cast %5 : vector<1x1x128xf32> to vector<1x128xf32>
    %7 = vector.broadcast %6 : vector<1x128xf32> to vector<128x128xf32>
    %8 = arith.addf %4, %7 : vector<128x128xf32>
    %c0_8 = arith.constant 0 : index
    %c0_9 = arith.constant 0 : index
    %c0_10 = arith.constant 0 : index
    %9 = vector.load %arg5[%c0_8, %c0_9, %c0_10] : memref<1x128x128xf32, #tpu.memory_space<vmem>>, vector<1x128x128xf32>
    %10 = vector.shape_cast %9 : vector<1x128x128xf32> to vector<128x128xf32>
    %11 = vector.shape_cast %8 : vector<128x128xf32> to vector<1x128x128xf32>
    tpu.vector_store %arg5[%c0_8, %c0_9, %c0_10], %11 {strides = array<i32>} : memref<1x128x128xf32, #tpu.memory_space<vmem>>, vector<1x128x128xf32>,
    return
  }
  func.func @transform_0(%arg0: i32, %arg1: i32) -> (i32, i32, i32) {
    %c0_i32 = arith.constant 0 : i32
    %c0_i32_0 = arith.constant 0 : i32
    return %arg0, %arg1, %c0_i32 : i32, i32, i32
  }
  func.func @transform_1(%arg0: i32, %arg1: i32) -> (i32, i32, i32) {
    %c0_i32 = arith.constant 0 : i32
    %c0_i32_0 = arith.constant 0 : i32
    %c0_i32_1 = arith.constant 0 : i32
    return %arg0, %c0_i32, %c0_i32_0 : i32, i32, i32
  }
  func.func @transform_2(%arg0: i32, %arg1: i32) -> (i32, i32, i32) {
    %c0_i32 = arith.constant 0 : i32
    %c0_i32_0 = arith.constant 0 : i32
    %c0_i32_1 = arith.constant 0 : i32
    return %arg0, %c0_i32, %c0_i32_0 : i32, i32, i32
  }
  func.func @transform_3(%arg0: i32, %arg1: i32) -> (i32, i32, i32) {
    %c0_i32 = arith.constant 0 : i32
    %c0_i32_0 = arith.constant 0 : i32
    return %arg0, %arg1, %c0_i32 : i32, i32, i32
  }
}

</mosaic_0001>

<llo_original>
// kernel: _conv_down_fwd.1
$region0: #{_conv_down_fwd.1}
  #allocation0 [shape = 'u32[]', space=smem, size = 0x4, offset = 0x4, fixed_abs, tag = 'smem constant byte address 0x4 - core index']
  #allocation1 [shape = 'u32[144,128]{1,0:T(1,128)}', space=vmem, size = 0x12000, scoped, tag = 'internal scratch']
  %s0 = inlined_call_operand.vmem [shape: bf16[1,128,576], index: 0, kind: input, shape index: {}]
  %s1 = inlined_call_operand.vmem [shape: bf16[1,576,128], index: 1, kind: input, shape index: {}]
  %s2 = inlined_call_operand.vmem [shape: f32[1,1,128], index: 2, kind: input, shape index: {}]
  %s3 = inlined_call_operand.hbm [shape: f32[1,128,128], index: 3, kind: output, shape index: {}]
  %s4 = sld [smem:[#allocation0]]
  $region22: #{_conv_down_fwd.1} parent=0
    _
  %s6 = ssub.s32 1, %s4
  %s7 = scalar_select 0, %s6, %s4
  $region1: #{_conv_down_fwd.1} parent=0
    #allocation2 [shape = 'u8[65536]{0}', space=vmem, size = 0x10000, scoped, tag = 'output window, operand 0, single buffered']
    #allocation3 [shape = 's32[1]{0}', space=sflag, size = 0x4, scoped, tag = 'scoped memory for _conv_down_fwd.1']
    %8 = vsyncpa [#allocation3], 0
    // Predicated region
    $region2: #{_conv_down_fwd.1} parent=1 // pred_check
      _
    $region3: #{_conv_down_fwd.1} parent=1 // pred_check_branch
      %10 = sbr.rel (0) target = $region5
    $region4: #{_conv_down_fwd.1} parent=1 // pred_region
      _
    $region5: #{_conv_down_fwd.1} parent=1 // pred_fallthru
      _
    // Predicated region
    $region6: #{_conv_down_fwd.1} parent=1 // pred_check
      _
    $region7: #{_conv_down_fwd.1} parent=1 // pred_check_branch
      %12 = sbr.rel (0) target = $region9
    $region8: #{_conv_down_fwd.1} parent=1 // pred_region
      _
    $region9: #{_conv_down_fwd.1} parent=1 // pred_fallthru
      _
    // Predicated region
    $region10: #{_conv_down_fwd.1} parent=1 // pred_check
      _
    $region11: #{_conv_down_fwd.1} parent=1 // pred_check_branch
      %14 = sbr.rel (0) target = $region13
    $region12: #{_conv_down_fwd.1} parent=1 // pred_region
      _
    $region13: #{_conv_down_fwd.1} parent=1 // pred_fallthru
      _
    %v16 = vld [vmem:[%s0] sm:$0xff]
    %v17 = vld [vmem:[%s0 + $0x8] sm:$0xff]
    %v18 = vld [vmem:[%s0 + $0x10] sm:$0xf]
    %v19 = vld [vmem:[%s0 + $0x14] sm:$0xff]
    %v20 = vld [vmem:[%s0 + $0x1c] sm:$0xff]
    %v21 = vld [vmem:[%s0 + $0x24] sm:$0xf]
    %v22 = vld [vmem:[%s0 + $0x28] sm:$0xff]
    %v23 = vld [vmem:[%s0 + $0x30] sm:$0xff]
    %v24 = vld [vmem:[%s0 + $0x38] sm:$0xf]
    %v25 = vld [vmem:[%s0 + $0x3c] sm:$0xff]
    %v26 = vld [vmem:[%s0 + $0x44] sm:$0xff]
    %v27 = vld [vmem:[%s0 + $0x4c] sm:$0xf]
    %v28 = vld [vmem:[%s0 + $0x50] sm:$0xff]
    %v29 = vld [vmem:[%s0 + $0x58] sm:$0xff]
    %v30 = vld [vmem:[%s0 + $0x60] sm:$0xf]
    %v31 = vld [vmem:[%s0 + $0x64] sm:$0xff]
    %v32 = vld [vmem:[%s0 + $0x6c] sm:$0xff]
    %v33 = vld [vmem:[%s0 + $0x74] sm:$0xf]
    %v34 = vld [vmem:[%s0 + $0x78] sm:$0xff]
    %v35 = vld [vmem:[%s0 + $0x80] sm:$0xff]
    %v36 = vld [vmem:[%s0 + $0x88] sm:$0xf]
    %v37 = vld [vmem:[%s0 + $0x8c] sm:$0xff]
    %v38 = vld [vmem:[%s0 + $0x94] sm:$0xff]
    %v39 = vld [vmem:[%s0 + $0x9c] sm:$0xf]
    %v40 = vld [vmem:[%s0 + $0xa0] sm:$0xff]
    %v41 = vld [vmem:[%s0 + $0xa8] sm:$0xff]
    %v42 = vld [vmem:[%s0 + $0xb0] sm:$0xf]
    %v43 = vld [vmem:[%s0 + $0xb4] sm:$0xff]
    %v44 = vld [vmem:[%s0 + $0xbc] sm:$0xff]
    %v45 = vld [vmem:[%s0 + $0xc4] sm:$0xf]
    %v46 = vld [vmem:[%s0 + $0xc8] sm:$0xff]
    %v47 = vld [vmem:[%s0 + $0xd0] sm:$0xff]
    %v48 = vld [vmem:[%s0 + $0xd8] sm:$0xf]
    %v49 = vld [vmem:[%s0 + $0xdc] sm:$0xff]
    %v50 = vld [vmem:[%s0 + $0xe4] sm:$0xff]
    %v51 = vld [vmem:[%s0 + $0xec] sm:$0xf]
    %v52 = vld [vmem:[%s0 + $0xf0] sm:$0xff]
    %v53 = vld [vmem:[%s0 + $0xf8] sm:$0xff]
    %v54 = vld [vmem:[%s0 + $0x100] sm:$0xf]
    %v55 = vld [vmem:[%s0 + $0x104] sm:$0xff]
    %v56 = vld [vmem:[%s0 + $0x10c] sm:$0xff]
    %v57 = vld [vmem:[%s0 + $0x114] sm:$0xf]
    %v58 = vld [vmem:[%s0 + $0x118] sm:$0xff]
    %v59 = vld [vmem:[%s0 + $0x120] sm:$0xff]
    %v60 = vld [vmem:[%s0 + $0x128] sm:$0xf]
    %v61 = vld [vmem:[%s0 + $0x12c] sm:$0xff]
    %v62 = vld [vmem:[%s0 + $0x134] sm:$0xff]
    %v63 = vld [vmem:[%s0 + $0x13c] sm:$0xf]
    %v64 = vld [vmem:[%s1] sm:$0xf]
    %v65 = vld [vmem:[%s1 + $0x4] sm:$0xf]
    %v66 = vld [vmem:[%s1 + $0x8] sm:$0xf]
    %v67 = vld [vmem:[%s1 + $0xc] sm:$0xf]
    %v68 = vld [vmem:[%s1 + $0x10] sm:$0xf]
    %v69 = vld [vmem:[%s1 + $0x14] sm:$0xf]
    %v70 = vld [vmem:[%s1 + $0x18] sm:$0xf]
    %v71 = vld [vmem:[%s1 + $0x1c] sm:$0xf]
    %v72 = vld [vmem:[%s1 + $0x20] sm:$0xf]
    %v73 = vld [vmem:[%s1 + $0x24] sm:$0xf]
    %v74 = vld [vmem:[%s1 + $0x28] sm:$0xf]
    %v75 = vld [vmem:[%s1 + $0x2c] sm:$0xf]
    %v76 = vld [vmem:[%s1 + $0x30] sm:$0xf]
    %v77 = vld [vmem:[%s1 + $0x34] sm:$0xf]
    %v78 = vld [vmem:[%s1 + $0x38] sm:$0xf]
    %v79 = vld [vmem:[%s1 + $0x3c] sm:$0xf]
    %v80 = vld [vmem:[%s1 + $0x40] sm:$0xf]
    %v81 = vld [vmem:[%s1 + $0x44] sm:$0xf]
    %v82 = vld [vmem:[%s1 + $0x48] sm:$0xf]
    %v83 = vld [vmem:[%s1 + $0x4c] sm:$0xf]
    %v84 = vld [vmem:[%s1 + $0x50] sm:$0xf]
    %v85 = vld [vmem:[%s1 + $0x54] sm:$0xf]
    %v86 = vld [vmem:[%s1 + $0x58] sm:$0xf]
    %v87 = vld [vmem:[%s1 + $0x5c] sm:$0xf]
    %v88 = vld [vmem:[%s1 + $0x60] sm:$0xf]
    %v89 = vld [vmem:[%s1 + $0x64] sm:$0xf]
    %v90 = vld [vmem:[%s1 + $0x68] sm:$0xf]
    %v91 = vld [vmem:[%s1 + $0x6c] sm:$0xf]
    %v92 = vld [vmem:[%s1 + $0x70] sm:$0xf]
    %v93 = vld [vmem:[%s1 + $0x74] sm:$0xf]
    %v94 = vld [vmem:[%s1 + $0x78] sm:$0xf]
    %v95 = vld [vmem:[%s1 + $0x7c] sm:$0xf]
    %v96 = vld [vmem:[%s1 + $0x80] sm:$0xf]
    %v97 = vld [vmem:[%s1 + $0x84] sm:$0xf]
    %v98 = vld [vmem:[%s1 + $0x88] sm:$0xf]
    %v99 = vld [vmem:[%s1 + $0x8c] sm:$0xf]
    %v100 = vld [vmem:[%s1 + $0x90] sm:$0xf]
    %v101 = vld [vmem:[%s1 + $0x94] sm:$0xf]
    %v102 = vld [vmem:[%s1 + $0x98] sm:$0xf]
    %v103 = vld [vmem:[%s1 + $0x9c] sm:$0xf]
    %v104 = vld [vmem:[%s1 + $0xa0] sm:$0xf]
    %v105 = vld [vmem:[%s1 + $0xa4] sm:$0xf]
    %v106 = vld [vmem:[%s1 + $0xa8] sm:$0xf]
    %v107 = vld [vmem:[%s1 + $0xac] sm:$0xf]
    %v108 = vld [vmem:[%s1 + $0xb0] sm:$0xf]
    %v109 = vld [vmem:[%s1 + $0xb4] sm:$0xf]
    %v110 = vld [vmem:[%s1 + $0xb8] sm:$0xf]
    %v111 = vld [vmem:[%s1 + $0xbc] sm:$0xf]
    %v112 = vld [vmem:[%s1 + $0xc0] sm:$0xf]
    %v113 = vld [vmem:[%s1 + $0xc4] sm:$0xf]
    %v114 = vld [vmem:[%s1 + $0xc8] sm:$0xf]
    %v115 = vld [vmem:[%s1 + $0xcc] sm:$0xf]
    %v116 = vld [vmem:[%s1 + $0xd0] sm:$0xf]
    %v117 = vld [vmem:[%s1 + $0xd4] sm:$0xf]
    %v118 = vld [vmem:[%s1 + $0xd8] sm:$0xf]
    %v119 = vld [vmem:[%s1 + $0xdc] sm:$0xf]
    %v120 = vld [vmem:[%s1 + $0xe0] sm:$0xf]
    %v121 = vld [vmem:[%s1 + $0xe4] sm:$0xf]
    %v122 = vld [vmem:[%s1 + $0xe8] sm:$0xf]
    %v123 = vld [vmem:[%s1 + $0xec] sm:$0xf]
    %v124 = vld [vmem:[%s1 + $0xf0] sm:$0xf]
    %v125 = vld [vmem:[%s1 + $0xf4] sm:$0xf]
    %v126 = vld [vmem:[%s1 + $0xf8] sm:$0xf]
    %v127 = vld [vmem:[%s1 + $0xfc] sm:$0xf]
    %v128 = vld [vmem:[%s1 + $0x100] sm:$0xf]
    %v129 = vld [vmem:[%s1 + $0x104] sm:$0xf]
    %v130 = vld [vmem:[%s1 + $0x108] sm:$0xf]
    %v131 = vld [vmem:[%s1 + $0x10c] sm:$0xf]
    %v132 = vld [vmem:[%s1 + $0x110] sm:$0xf]
    %v133 = vld [vmem:[%s1 + $0x114] sm:$0xf]
    %v134 = vld [vmem:[%s1 + $0x118] sm:$0xf]
    %v135 = vld [vmem:[%s1 + $0x11c] sm:$0xf]
    %v136 = vld [vmem:[%s2] sm:$0x1]
    %v138 = vlaneseq
    %v139 = vshrl.u32 %v138, 7
    %v140 = vsub.s32 0, %v139
    %v141 = vrot.slane %v136, %v140
    %v191 = vunpack.c.l.b16 %v16
    %v192 = vunpack.c.h.b16 %v16
    %v193 = vunpack.c.l.b16 %v17
    %v194 = vunpack.c.h.b16 %v17
    %v195 = vunpack.c.l.b16 %v18
    %v196 = vunpack.c.l.b16 %v19
    %v197 = vunpack.c.h.b16 %v19
    %v198 = vunpack.c.l.b16 %v20
    %v199 = vunpack.c.h.b16 %v20
    %v200 = vunpack.c.l.b16 %v21
    %v201 = vunpack.c.l.b16 %v22
    %v202 = vunpack.c.h.b16 %v22
    %v203 = vunpack.c.l.b16 %v23
    %v204 = vunpack.c.h.b16 %v23
    %v205 = vunpack.c.l.b16 %v24
    %v206 = vunpack.c.l.b16 %v25
    %v207 = vunpack.c.h.b16 %v25
    %v208 = vunpack.c.l.b16 %v26
    %v209 = vunpack.c.h.b16 %v26
    %v210 = vunpack.c.l.b16 %v27
    %v211 = vunpack.c.l.b16 %v28
    %v212 = vunpack.c.h.b16 %v28
    %v213 = vunpack.c.l.b16 %v29
    %v214 = vunpack.c.h.b16 %v29
    %v215 = vunpack.c.l.b16 %v30
    %v216 = vunpack.c.l.b16 %v31
    %v217 = vunpack.c.h.b16 %v31
    %v218 = vunpack.c.l.b16 %v32
    %v219 = vunpack.c.h.b16 %v32
    %v220 = vunpack.c.l.b16 %v33
    %v221 = vunpack.c.l.b16 %v34
    %v222 = vunpack.c.h.b16 %v34
    %v223 = vunpack.c.l.b16 %v35
    %v224 = vunpack.c.h.b16 %v35
    %v225 = vunpack.c.l.b16 %v36
    %v226 = vunpack.c.l.b16 %v37
    %v227 = vunpack.c.h.b16 %v37
    %v228 = vunpack.c.l.b16 %v38
    %v229 = vunpack.c.h.b16 %v38
    %v230 = vunpack.c.l.b16 %v39
    %v231 = vunpack.c.l.b16 %v40
    %v232 = vunpack.c.h.b16 %v40
    %v233 = vunpack.c.l.b16 %v41
    %v234 = vunpack.c.h.b16 %v41
    %v235 = vunpack.c.l.b16 %v42
    %v236 = vunpack.c.l.b16 %v43
    %v237 = vunpack.c.h.b16 %v43
    %v238 = vunpack.c.l.b16 %v44
    %v239 = vunpack.c.h.b16 %v44
    %v240 = vunpack.c.l.b16 %v45
    %v241 = vunpack.c.l.b16 %v46
    %v242 = vunpack.c.h.b16 %v46
    %v243 = vunpack.c.l.b16 %v47
    %v244 = vunpack.c.h.b16 %v47
    %v245 = vunpack.c.l.b16 %v48
    %v246 = vunpack.c.l.b16 %v49
    %v247 = vunpack.c.h.b16 %v49
    %v248 = vunpack.c.l.b16 %v50
    %v249 = vunpack.c.h.b16 %v50
    %v250 = vunpack.c.l.b16 %v51
    %v251 = vunpack.c.l.b16 %v52
    %v252 = vunpack.c.h.b16 %v52
    %v253 = vunpack.c.l.b16 %v53
    %v254 = vunpack.c.h.b16 %v53
    %v255 = vunpack.c.l.b16 %v54
    %v256 = vunpack.c.l.b16 %v55
    %v257 = vunpack.c.h.b16 %v55
    %v258 = vunpack.c.l.b16 %v56
    %v259 = vunpack.c.h.b16 %v56
    %v260 = vunpack.c.l.b16 %v57
    %v261 = vunpack.c.l.b16 %v58
    %v262 = vunpack.c.h.b16 %v58
    %v263 = vunpack.c.l.b16 %v59
    %v264 = vunpack.c.h.b16 %v59
    %v265 = vunpack.c.l.b16 %v60
    %v266 = vunpack.c.l.b16 %v61
    %v267 = vunpack.c.h.b16 %v61
    %v268 = vunpack.c.l.b16 %v62
    %v269 = vunpack.c.h.b16 %v62
    %v270 = vunpack.c.l.b16 %v63
    %v271 = vpack.c.b16 %v196, %v191
    %v272 = vpack.c.b16 %v197, %v192
    %v273 = vpack.c.b16 %v198, %v193
    %v274 = vpack.c.b16 %v199, %v194
    %v275 = vpack.c.b16 %v200, %v195
    %v276 = vpack.c.b16 %v206, %v201
    %v277 = vpack.c.b16 %v207, %v202
    %v278 = vpack.c.b16 %v208, %v203
    %v279 = vpack.c.b16 %v209, %v204
    %v280 = vpack.c.b16 %v210, %v205
    %v281 = vpack.c.b16 %v216, %v211
    %v282 = vpack.c.b16 %v217, %v212
    %v283 = vpack.c.b16 %v218, %v213
    %v284 = vpack.c.b16 %v219, %v214
    %v285 = vpack.c.b16 %v220, %v215
    %v286 = vpack.c.b16 %v226, %v221
    %v287 = vpack.c.b16 %v227, %v222
    %v288 = vpack.c.b16 %v228, %v223
    %v289 = vpack.c.b16 %v229, %v224
    %v290 = vpack.c.b16 %v230, %v225
    %v291 = vpack.c.b16 %v236, %v231
    %v292 = vpack.c.b16 %v237, %v232
    %v293 = vpack.c.b16 %v238, %v233
    %v294 = vpack.c.b16 %v239, %v234
    %v295 = vpack.c.b16 %v240, %v235
    %v296 = vpack.c.b16 %v246, %v241
    %v297 = vpack.c.b16 %v247, %v242
    %v298 = vpack.c.b16 %v248, %v243
    %v299 = vpack.c.b16 %v249, %v244
    %v300 = vpack.c.b16 %v250, %v245
    %v301 = vpack.c.b16 %v256, %v251
    %v302 = vpack.c.b16 %v257, %v252
    %v303 = vpack.c.b16 %v258, %v253
    %v304 = vpack.c.b16 %v259, %v254
    %v305 = vpack.c.b16 %v260, %v255
    %v306 = vpack.c.b16 %v266, %v261
    %v307 = vpack.c.b16 %v267, %v262
    %v308 = vpack.c.b16 %v268, %v263
    %v309 = vpack.c.b16 %v269, %v264
    %v310 = vpack.c.b16 %v270, %v265
    %v415 = vunpack.c.l.b16 %v64
    %v416 = vunpack.c.l.b16 %v65
    %v417 = vunpack.c.l.b16 %v66
    %v418 = vunpack.c.l.b16 %v67
    %v419 = vunpack.c.l.b16 %v68
    %v420 = vunpack.c.l.b16 %v69
    %v421 = vunpack.c.l.b16 %v70
    %v422 = vunpack.c.l.b16 %v71
    %v423 = vunpack.c.l.b16 %v72
    %v424 = vunpack.c.l.b16 %v73
    %v425 = vunpack.c.l.b16 %v74
    %v426 = vunpack.c.l.b16 %v75
    %v427 = vunpack.c.l.b16 %v76
    %v428 = vunpack.c.l.b16 %v77
    %v429 = vunpack.c.l.b16 %v78
    %v430 = vunpack.c.l.b16 %v79
    %v431 = vunpack.c.l.b16 %v80
    %v432 = vunpack.c.l.b16 %v81
    %v433 = vunpack.c.l.b16 %v82
    %v434 = vunpack.c.l.b16 %v83
    %v435 = vunpack.c.l.b16 %v84
    %v436 = vunpack.c.l.b16 %v85
    %v437 = vunpack.c.l.b16 %v86
    %v438 = vunpack.c.l.b16 %v87
    %v439 = vunpack.c.l.b16 %v88
    %v440 = vunpack.c.l.b16 %v89
    %v441 = vunpack.c.l.b16 %v90
    %v442 = vunpack.c.l.b16 %v91
    %v443 = vunpack.c.l.b16 %v92
    %v444 = vunpack.c.l.b16 %v93
    %v445 = vunpack.c.l.b16 %v94
    %v446 = vunpack.c.l.b16 %v95
    %v447 = vunpack.c.l.b16 %v96
    %v448 = vunpack.c.l.b16 %v97
    %v449 = vunpack.c.l.b16 %v98
    %v450 = vunpack.c.l.b16 %v99
    %v451 = vunpack.c.l.b16 %v100
    %v452 = vunpack.c.l.b16 %v101
    %v453 = vunpack.c.l.b16 %v102
    %v454 = vunpack.c.l.b16 %v103
    %v455 = vunpack.c.l.b16 %v104
    %v456 = vunpack.c.l.b16 %v105
    %v457 = vunpack.c.l.b16 %v106
    %v458 = vunpack.c.l.b16 %v107
    %v459 = vunpack.c.l.b16 %v108
    %v460 = vunpack.c.l.b16 %v109
    %v461 = vunpack.c.l.b16 %v110
    %v462 = vunpack.c.l.b16 %v111
    %v463 = vunpack.c.l.b16 %v112
    %v464 = vunpack.c.l.b16 %v113
    %v465 = vunpack.c.l.b16 %v114
    %v466 = vunpack.c.l.b16 %v115
    %v467 = vunpack.c.l.b16 %v116
    %v468 = vunpack.c.l.b16 %v117
    %v469 = vunpack.c.l.b16 %v118
    %v470 = vunpack.c.l.b16 %v119
    %v471 = vunpack.c.l.b16 %v120
    %v472 = vunpack.c.l.b16 %v121
    %v473 = vunpack.c.l.b16 %v122
    %v474 = vunpack.c.l.b16 %v123
    %v475 = vunpack.c.l.b16 %v124
    %v476 = vunpack.c.l.b16 %v125
    %v477 = vunpack.c.l.b16 %v126
    %v478 = vunpack.c.l.b16 %v127
    %v479 = vunpack.c.l.b16 %v128
    %v480 = vunpack.c.l.b16 %v129
    %v481 = vunpack.c.l.b16 %v130
    %v482 = vunpack.c.l.b16 %v131
    %v483 = vunpack.c.l.b16 %v132
    %v484 = vunpack.c.l.b16 %v133
    %v485 = vunpack.c.l.b16 %v134
    %v486 = vunpack.c.l.b16 %v135
    %v487 = vpack.c.b16 %v416, %v415
    %v488 = vpack.c.b16 %v418, %v417
    %v489 = vpack.c.b16 %v420, %v419
    %v490 = vpack.c.b16 %v422, %v421
    %v491 = vpack.c.b16 %v424, %v423
    %v492 = vpack.c.b16 %v426, %v425
    %v493 = vpack.c.b16 %v428, %v427
    %v494 = vpack.c.b16 %v430, %v429
    %v495 = vpack.c.b16 %v432, %v431
    %v496 = vpack.c.b16 %v434, %v433
    %v497 = vpack.c.b16 %v436, %v435
    %v498 = vpack.c.b16 %v438, %v437
    %v499 = vpack.c.b16 %v440, %v439
    %v500 = vpack.c.b16 %v442, %v441
    %v501 = vpack.c.b16 %v444, %v443
    %v502 = vpack.c.b16 %v446, %v445
    %v503 = vpack.c.b16 %v448, %v447
    %v504 = vpack.c.b16 %v450, %v449
    %v505 = vpack.c.b16 %v452, %v451
    %v506 = vpack.c.b16 %v454, %v453
    %v507 = vpack.c.b16 %v456, %v455
    %v508 = vpack.c.b16 %v458, %v457
    %v509 = vpack.c.b16 %v460, %v459
    %v510 = vpack.c.b16 %v462, %v461
    %v511 = vpack.c.b16 %v464, %v463
    %v512 = vpack.c.b16 %v466, %v465
    %v513 = vpack.c.b16 %v468, %v467
    %v514 = vpack.c.b16 %v470, %v469
    %v515 = vpack.c.b16 %v472, %v471
    %v516 = vpack.c.b16 %v474, %v473
    %v517 = vpack.c.b16 %v476, %v475
    %v518 = vpack.c.b16 %v478, %v477
    %v519 = vpack.c.b16 %v480, %v479
    %v520 = vpack.c.b16 %v482, %v481
    %v521 = vpack.c.b16 %v484, %v483
    %v522 = vpack.c.b16 %v486, %v485
    %vm559 = vcmask 523264
    %v561 = vsel %vm559, %v275, 0
    %v564 = vsel %vm559, %v280, 0
    %v567 = vsel %vm559, %v285, 0
    %v570 = vsel %vm559, %v290, 0
    %v573 = vsel %vm559, %v295, 0
    %v576 = vsel %vm559, %v300, 0
    %v579 = vsel %vm559, %v305, 0
    %v582 = vsel %vm559, %v310, 0
    %584 = vmatprep.subr.bf16.mxu0 0
    %585 = vmatpush1.bf16.msra.mxu0 %v487
    %586 = vmatprep.subr.bf16.mxu0 0
    %587 = vmatpush1.bf16.msra.mxu0 %v488
    %588 = vmatprep.subr.bf16.mxu0 0
    %589 = vmatpush1.bf16.msra.mxu0 %v489
    %590 = vmatprep.subr.bf16.mxu0 0
    %591 = vmatpush1.bf16.msra.mxu0 %v490
    %592 = vmatprep.subr.bf16.mxu0 0
    %593 = vmatpush1.bf16.msra.mxu0 %v491
    %594 = vmatprep.subr.bf16.mxu0 0
    %595 = vmatpush1.bf16.msra.mxu0 %v492
    %596 = vmatprep.subr.bf16.mxu0 0
    %597 = vmatpush1.bf16.msra.mxu0 %v493
    %598 = vmatprep.subr.bf16.mxu0 0
    %599 = vmatpush1.bf16.msra.mxu0 %v494
    %600 = vmatprep.subr.bf16.mxu0 0
    %601 = vmatpush1.bf16.msra.mxu0 %v495
    %602 = vmatprep.subr.bf16.mxu0 0
    %603 = vmatpush1.bf16.msra.mxu0 %v496
    %604 = vmatprep.subr.bf16.mxu0 0
    %605 = vmatpush1.bf16.msra.mxu0 %v497
    %606 = vmatprep.subr.bf16.mxu0 0
    %607 = vmatpush1.bf16.msra.mxu0 %v498
    %608 = vmatprep.subr.bf16.mxu0 0
    %609 = vmatpush1.bf16.msra.mxu0 %v499
    %610 = vmatprep.subr.bf16.mxu0 0
    %611 = vmatpush1.bf16.msra.mxu0 %v500
    %612 = vmatprep.subr.bf16.mxu0 0
    %613 = vmatpush1.bf16.msra.mxu0 %v501
    %614 = vmatprep.subr.bf16.mxu0 0
    %615 = vmatpush1.bf16.msra.mxu0 %v502
    %616 = vmatprep.mubr.bf16.mxu0 %v272
    %617 = vmatmul.mubr.bf16.gmra.mrb[0].mxu0 %v271
    %v618 = vpop.f32.mrb[0].mxu0
    %v619 = vadd.f32 %v141, %v618
    %v620 = vpop.f32.mrb[0].mxu0
    %v621 = vpop.f32.mrb[0].mxu0
    %v622 = vadd.f32 %v141, %v621
    %v623 = vpop.f32.mrb[0].mxu0
    %624 = vmatprep.mubr.bf16.mxu0 %v277
    %625 = vmatmul.mubr.bf16.gmra.mrb[0].mxu0 %v276
    %v626 = vpop.f32.mrb[0].mxu0
    %v627 = vadd.f32 %v141, %v626
    %v628 = vpop.f32.mrb[0].mxu0
    %v629 = vpop.f32.mrb[0].mxu0
    %v630 = vadd.f32 %v141, %v629
    %v631 = vpop.f32.mrb[0].mxu0
    %632 = vmatprep.mubr.bf16.mxu0 %v282
    %633 = vmatmul.mubr.bf16.gmra.mrb[0].mxu0 %v281
    %v634 = vpop.f32.mrb[0].mxu0
    %v635 = vadd.f32 %v141, %v634
    %v636 = vpop.f32.mrb[0].mxu0
    %v637 = vpop.f32.mrb[0].mxu0
    %v638 = vadd.f32 %v141, %v637
    %v639 = vpop.f32.mrb[0].mxu0
    %640 = vmatprep.mubr.bf16.mxu0 %v287
    %641 = vmatmul.mubr.bf16.gmra.mrb[0].mxu0 %v286
    %v642 = vpop.f32.mrb[0].mxu0
    %v643 = vadd.f32 %v141, %v642
    %v644 = vpop.f32.mrb[0].mxu0
    %v645 = vpop.f32.mrb[0].mxu0
    %v646 = vadd.f32 %v141, %v645
    %v647 = vpop.f32.mrb[0].mxu0
    %648 = vmatprep.mubr.bf16.mxu0 %v292
    %649 = vmatmul.mubr.bf16.gmra.mrb[0].mxu0 %v291
    %v650 = vpop.f32.mrb[0].mxu0
    %v651 = vadd.f32 %v141, %v650
    %v652 = vpop.f32.mrb[0].mxu0
    %v653 = vpop.f32.mrb[0].mxu0
    %v654 = vadd.f32 %v141, %v653
    %v655 = vpop.f32.mrb[0].mxu0
    %656 = vmatprep.mubr.bf16.mxu0 %v297
    %657 = vmatmul.mubr.bf16.gmra.mrb[0].mxu0 %v296
    %v658 = vpop.f32.mrb[0].mxu0
    %v659 = vadd.f32 %v141, %v658
    %v660 = vpop.f32.mrb[0].mxu0
    %v661 = vpop.f32.mrb[0].mxu0
    %v662 = vadd.f32 %v141, %v661
    %v663 = vpop.f32.mrb[0].mxu0
    %664 = vmatprep.mubr.bf16.mxu0 %v302
    %665 = vmatmul.mubr.bf16.gmra.mrb[0].mxu0 %v301
    %v666 = vpop.f32.mrb[0].mxu0
    %v667 = vadd.f32 %v141, %v666
    %v668 = vpop.f32.mrb[0].mxu0
    %v669 = vpop.f32.mrb[0].mxu0
    %v670 = vadd.f32 %v141, %v669
    %v671 = vpop.f32.mrb[0].mxu0
    %672 = vmatprep.mubr.bf16.mxu0 %v307
    %673 = vmatmul.mubr.bf16.gmra.mrb[0].mxu0 %v306
    %v674 = vpop.f32.mrb[0].mxu0
    %v675 = vadd.f32 %v141, %v674
    %v676 = vpop.f32.mrb[0].mxu0
    %v677 = vpop.f32.mrb[0].mxu0
    %v678 = vadd.f32 %v141, %v677
    %v679 = vpop.f32.mrb[0].mxu0
    %680 = vdwg.mxu0
    %681 = vmatprep.subr.bf16.mxu0 0
    %682 = vmatpush1.bf16.msra.mxu0 %v503
    %683 = vmatprep.subr.bf16.mxu0 0
    %684 = vmatpush1.bf16.msra.mxu0 %v504
    %685 = vmatprep.subr.bf16.mxu0 0
    %686 = vmatpush1.bf16.msra.mxu0 %v505
    %687 = vmatprep.subr.bf16.mxu0 0
    %688 = vmatpush1.bf16.msra.mxu0 %v506
    %689 = vmatprep.subr.bf16.mxu0 0
    %690 = vmatpush1.bf16.msra.mxu0 %v507
    %691 = vmatprep.subr.bf16.mxu0 0
    %692 = vmatpush1.bf16.msra.mxu0 %v508
    %693 = vmatprep.subr.bf16.mxu0 0
    %694 = vmatpush1.bf16.msra.mxu0 %v509
    %695 = vmatprep.subr.bf16.mxu0 0
    %696 = vmatpush1.bf16.msra.mxu0 %v510
    %697 = vmatprep.subr.bf16.mxu0 0
    %698 = vmatpush1.bf16.msra.mxu0 %v511
    %699 = vmatprep.subr.bf16.mxu0 0
    %700 = vmatpush1.bf16.msra.mxu0 %v512
    %701 = vmatprep.subr.bf16.mxu0 0
    %702 = vmatpush1.bf16.msra.mxu0 %v513
    %703 = vmatprep.subr.bf16.mxu0 0
    %704 = vmatpush1.bf16.msra.mxu0 %v514
    %705 = vmatprep.subr.bf16.mxu0 0
    %706 = vmatpush1.bf16.msra.mxu0 %v515
    %707 = vmatprep.subr.bf16.mxu0 0
    %708 = vmatpush1.bf16.msra.mxu0 %v516
    %709 = vmatprep.subr.bf16.mxu0 0
    %710 = vmatpush1.bf16.msra.mxu0 %v517
    %711 = vmatprep.subr.bf16.mxu0 0
    %712 = vmatpush1.bf16.msra.mxu0 %v518
    %713 = vmatprep.mubr.bf16.mxu0 %v274
    %714 = vmatmul.mubr.bf16.gmra.mrb[0].mxu0 %v273
    %v715 = vpop.f32.mrb[0].mxu0
    %v716 = vadd.f32 %v619, %v715
    %v717 = vpop.f32.mrb[0].mxu0
    %v718 = vpop.f32.mrb[0].mxu0
    %v719 = vadd.f32 %v622, %v718
    %v720 = vpop.f32.mrb[0].mxu0
    %721 = vmatprep.mubr.bf16.mxu0 %v279
    %722 = vmatmul.mubr.bf16.gmra.mrb[0].mxu0 %v278
    %v723 = vpop.f32.mrb[0].mxu0
    %v724 = vadd.f32 %v627, %v723
    %v725 = vpop.f32.mrb[0].mxu0
    %v726 = vpop.f32.mrb[0].mxu0
    %v727 = vadd.f32 %v630, %v726
    %v728 = vpop.f32.mrb[0].mxu0
    %729 = vmatprep.mubr.bf16.mxu0 %v284
    %730 = vmatmul.mubr.bf16.gmra.mrb[0].mxu0 %v283
    %v731 = vpop.f32.mrb[0].mxu0
    %v732 = vadd.f32 %v635, %v731
    %v733 = vpop.f32.mrb[0].mxu0
    %v734 = vpop.f32.mrb[0].mxu0
    %v735 = vadd.f32 %v638, %v734
    %v736 = vpop.f32.mrb[0].mxu0
    %737 = vmatprep.mubr.bf16.mxu0 %v289
    %738 = vmatmul.mubr.bf16.gmra.mrb[0].mxu0 %v288
    %v739 = vpop.f32.mrb[0].mxu0
    %v740 = vadd.f32 %v643, %v739
    %v741 = vpop.f32.mrb[0].mxu0
    %v742 = vpop.f32.mrb[0].mxu0
    %v743 = vadd.f32 %v646, %v742
    %v744 = vpop.f32.mrb[0].mxu0
    %745 = vmatprep.mubr.bf16.mxu0 %v294
    %746 = vmatmul.mubr.bf16.gmra.mrb[0].mxu0 %v293
    %v747 = vpop.f32.mrb[0].mxu0
    %v748 = vadd.f32 %v651, %v747
    %v749 = vpop.f32.mrb[0].mxu0
    %v750 = vpop.f32.mrb[0].mxu0
    %v751 = vadd.f32 %v654, %v750
    %v752 = vpop.f32.mrb[0].mxu0
    %753 = vmatprep.mubr.bf16.mxu0 %v299
    %754 = vmatmul.mubr.bf16.gmra.mrb[0].mxu0 %v298
    %v755 = vpop.f32.mrb[0].mxu0
    %v756 = vadd.f32 %v659, %v755
    %v757 = vpop.f32.mrb[0].mxu0
    %v758 = vpop.f32.mrb[0].mxu0
    %v759 = vadd.f32 %v662, %v758
    %v760 = vpop.f32.mrb[0].mxu0
    %761 = vmatprep.mubr.bf16.mxu0 %v304
    %762 = vmatmul.mubr.bf16.gmra.mrb[0].mxu0 %v303
    %v763 = vpop.f32.mrb[0].mxu0
    %v764 = vadd.f32 %v667, %v763
    %v765 = vpop.f32.mrb[0].mxu0
    %v766 = vpop.f32.mrb[0].mxu0
    %v767 = vadd.f32 %v670, %v766
    %v768 = vpop.f32.mrb[0].mxu0
    %769 = vmatprep.mubr.bf16.mxu0 %v309
    %770 = vmatmul.mubr.bf16.gmra.mrb[0].mxu0 %v308
    %v771 = vpop.f32.mrb[0].mxu0
    %v772 = vadd.f32 %v675, %v771
    %v773 = vpop.f32.mrb[0].mxu0
    %v774 = vpop.f32.mrb[0].mxu0
    %v775 = vadd.f32 %v678, %v774
    %v776 = vpop.f32.mrb[0].mxu0
    %777 = vdwg.mxu0
    %778 = vmatprep.subr.bf16.mxu0 0
    %779 = vmatpush1.bf16.msra.mxu0 %v519
    %780 = vmatprep.subr.bf16.mxu0 0
    %781 = vmatpush1.bf16.msra.mxu0 %v520
    %782 = vmatprep.subr.bf16.mxu0 0
    %783 = vmatpush1.bf16.msra.mxu0 %v521
    %784 = vmatprep.subr.bf16.mxu0 0
    %785 = vmatpush1.bf16.msra.mxu0 %v522
    %786 = vmatprep.subr.bf16.mxu0 0
    %787 = vmatpush1.bf16.msra.mxu0 0
    %788 = vmatprep.subr.bf16.mxu0 0
    %789 = vmatpush1.bf16.msra.mxu0 0
    %790 = vmatprep.subr.bf16.mxu0 0
    %791 = vmatpush1.bf16.msra.mxu0 0
    %792 = vmatprep.subr.bf16.mxu0 0
    %793 = vmatpush1.bf16.msra.mxu0 0
    %794 = vmatprep.subr.bf16.mxu0 0
    %795 = vmatpush1.bf16.msra.mxu0 0
    %796 = vmatprep.subr.bf16.mxu0 0
    %797 = vmatpush1.bf16.msra.mxu0 0
    %798 = vmatprep.subr.bf16.mxu0 0
    %799 = vmatpush1.bf16.msra.mxu0 0
    %800 = vmatprep.subr.bf16.mxu0 0
    %801 = vmatpush1.bf16.msra.mxu0 0
    %802 = vmatprep.subr.bf16.mxu0 0
    %803 = vmatpush1.bf16.msra.mxu0 0
    %804 = vmatprep.subr.bf16.mxu0 0
    %805 = vmatpush1.bf16.msra.mxu0 0
    %806 = vmatprep.subr.bf16.mxu0 0
    %807 = vmatpush1.bf16.msra.mxu0 0
    %808 = vmatprep.subr.bf16.mxu0 0
    %809 = vmatpush1.bf16.msra.mxu0 0
    %810 = vmatprep.mubr.bf16.mxu0 0
    %811 = vmatmul.mubr.bf16.gmra.mrb[0].mxu0 %v561
    %v812 = vpop.f32.mrb[0].mxu0
    %v813 = vadd.f32 %v716, %v812
    %v814 = vpop.f32.mrb[0].mxu0
    %v815 = vpop.f32.mrb[0].mxu0
    %v816 = vadd.f32 %v719, %v815
    %v817 = vpop.f32.mrb[0].mxu0
    %818 = vmatprep.mubr.bf16.mxu0 0
    %819 = vmatmul.mubr.bf16.gmra.mrb[0].mxu0 %v564
    %v820 = vpop.f32.mrb[0].mxu0
    %v821 = vadd.f32 %v724, %v820
    %v822 = vpop.f32.mrb[0].mxu0
    %v823 = vpop.f32.mrb[0].mxu0
    %v824 = vadd.f32 %v727, %v823
    %v825 = vpop.f32.mrb[0].mxu0
    %826 = vmatprep.mubr.bf16.mxu0 0
    %827 = vmatmul.mubr.bf16.gmra.mrb[0].mxu0 %v567
    %v828 = vpop.f32.mrb[0].mxu0
    %v829 = vadd.f32 %v732, %v828
    %v830 = vpop.f32.mrb[0].mxu0
    %v831 = vpop.f32.mrb[0].mxu0
    %v832 = vadd.f32 %v735, %v831
    %v833 = vpop.f32.mrb[0].mxu0
    %834 = vmatprep.mubr.bf16.mxu0 0
    %835 = vmatmul.mubr.bf16.gmra.mrb[0].mxu0 %v570
    %v836 = vpop.f32.mrb[0].mxu0
    %v837 = vadd.f32 %v740, %v836
    %v838 = vpop.f32.mrb[0].mxu0
    %v839 = vpop.f32.mrb[0].mxu0
    %v840 = vadd.f32 %v743, %v839
    %v841 = vpop.f32.mrb[0].mxu0
    %842 = vmatprep.mubr.bf16.mxu0 0
    %843 = vmatmul.mubr.bf16.gmra.mrb[0].mxu0 %v573
    %v844 = vpop.f32.mrb[0].mxu0
    %v845 = vadd.f32 %v748, %v844
    %v846 = vpop.f32.mrb[0].mxu0
    %v847 = vpop.f32.mrb[0].mxu0
    %v848 = vadd.f32 %v751, %v847
    %v849 = vpop.f32.mrb[0].mxu0
    %850 = vmatprep.mubr.bf16.mxu0 0
    %851 = vmatmul.mubr.bf16.gmra.mrb[0].mxu0 %v576
    %v852 = vpop.f32.mrb[0].mxu0
    %v853 = vadd.f32 %v756, %v852
    %v854 = vpop.f32.mrb[0].mxu0
    %v855 = vpop.f32.mrb[0].mxu0
    %v856 = vadd.f32 %v759, %v855
    %v857 = vpop.f32.mrb[0].mxu0
    %858 = vmatprep.mubr.bf16.mxu0 0
    %859 = vmatmul.mubr.bf16.gmra.mrb[0].mxu0 %v579
    %v860 = vpop.f32.mrb[0].mxu0
    %v861 = vadd.f32 %v764, %v860
    %v862 = vpop.f32.mrb[0].mxu0
    %v863 = vpop.f32.mrb[0].mxu0
    %v864 = vadd.f32 %v767, %v863
    %v865 = vpop.f32.mrb[0].mxu0
    %866 = vmatprep.mubr.bf16.mxu0 0
    %867 = vmatmul.mubr.bf16.gmra.mrb[0].mxu0 %v582
    %v868 = vpop.f32.mrb[0].mxu0
    %v869 = vadd.f32 %v772, %v868
    %v870 = vpop.f32.mrb[0].mxu0
    %v871 = vpop.f32.mrb[0].mxu0
    %v872 = vadd.f32 %v775, %v871
    %v873 = vpop.f32.mrb[0].mxu0
    %874 = vdwg.mxu0
    %875 = vst [vmem:[#allocation2] sm:$0xff] %v813
    %876 = vst [vmem:[#allocation2 + $0x8] sm:$0xff] %v816
    %877 = vst [vmem:[#allocation2 + $0x10] sm:$0xff] %v821
    %878 = vst [vmem:[#allocation2 + $0x18] sm:$0xff] %v824
    %879 = vst [vmem:[#allocation2 + $0x20] sm:$0xff] %v829
    %880 = vst [vmem:[#allocation2 + $0x28] sm:$0xff] %v832
    %881 = vst [vmem:[#allocation2 + $0x30] sm:$0xff] %v837
    %882 = vst [vmem:[#allocation2 + $0x38] sm:$0xff] %v840
    %883 = vst [vmem:[#allocation2 + $0x40] sm:$0xff] %v845
    %884 = vst [vmem:[#allocation2 + $0x48] sm:$0xff] %v848
    %885 = vst [vmem:[#allocation2 + $0x50] sm:$0xff] %v853
    %886 = vst [vmem:[#allocation2 + $0x58] sm:$0xff] %v856
    %887 = vst [vmem:[#allocation2 + $0x60] sm:$0xff] %v861
    %888 = vst [vmem:[#allocation2 + $0x68] sm:$0xff] %v864
    %889 = vst [vmem:[#allocation2 + $0x70] sm:$0xff] %v869
    %890 = vst [vmem:[#allocation2 + $0x78] sm:$0xff] %v872
    // Predicated region
    $region14: #{_conv_down_fwd.1} parent=1 // pred_check
      _
    $region15: #{_conv_down_fwd.1} parent=1 // pred_check_branch
      %892 = sbr.rel (0) target = $region17
    $region16: #{_conv_down_fwd.1} parent=1 // pred_region
      %s894 = ssub.s32 2048, 2048
      %895 = vsyncadd [#allocation3], %s894
      %s896 = sshll.u32 [#allocation2], 4
      %s897 = int_to_ptr.vmem [resolvable:$true] %s896
      %902 = dma.vmem_to_hbm [thread:$0]  %s897, 2048, %s3, [#allocation3], 128, 128, 8
    $region17: #{_conv_down_fwd.1} parent=1 // pred_fallthru
      _
    // Predicated region
    $region18: #{_conv_down_fwd.1} parent=1 // pred_check
      _
    $region19: #{_conv_down_fwd.1} parent=1 // pred_check_branch
      %904 = sbr.rel (0) target = $region21
    $region20: #{_conv_down_fwd.1} parent=1 // pred_region
      %905 = dma.done [#allocation3], 2048
    $region21: #{_conv_down_fwd.1} parent=1 // pred_fallthru
      _
    %906 = vsyncpa [#allocation3], 1

</llo_original>
